<compile_context>
chip_gen: v5e
topology: v5e:2x2
jax: 0.10.0
libtpu: 0.0.40
codegen_flags: <defaults>
</compile_context>

<pallas_src>
import functools

import jax
import jax.numpy as jnp
import numpy as np
from jax.experimental import pallas as pl
from jax.experimental.pallas import tpu as pltpu


def _round_up(x, m):
    return (x + m - 1) // m * m


def _derive_vmem_limit(need_bytes, *, headroom_bytes=16 * 1024 * 1024):
    """vmem_limit_bytes from the real buffer footprint, clamped to physical VMEM."""
    try:
        phys = int(pltpu.get_tpu_info().vmem_capacity_bytes)
    except Exception:  # pragma: no cover — conservative default (v7x per-TC VMEM)
        phys = 64 * 1024 * 1024
    want = int(need_bytes * 1.25) + headroom_bytes
    return int(max(min(want, phys), 32 * 1024 * 1024))


# ----------------------------------------------------------------------------
# Pallas kernel 1: entity-span mean pooling (SpanExtractor, pooling='mean')
# ----------------------------------------------------------------------------
def _span_pool_kernel(x_ref, s_ref, e_ref, o_ref):
    x = x_ref[0]                                            # (L, D) f32
    s = s_ref[0]                                            # (S_pad, 1) int32
    e = e_ref[0]                                            # (S_pad, 1) int32
    s_pad, _ = s.shape
    l = x.shape[0]
    # Mask built in-kernel: VPU compares against an iota (no HBM mask round trip).
    pos = jax.lax.broadcasted_iota(jnp.int32, (s_pad, l), 1)
    m = ((pos >= s) & (pos <= e)).astype(jnp.float32)       # (S_pad, L)
    summed = jnp.dot(m, x, preferred_element_type=jnp.float32)   # (S_pad, D) on MXU
    # Count = span length (clamped), no cross-lane (XLU) reduction needed.
    cnt = jnp.maximum(e - s + 1, 1).astype(jnp.float32)     # (S_pad, 1)
    o_ref[0] = summed / cnt


def span_mean_pool(x, spans):
    """x: (N, L, D) f32; spans: (N, S, 2) inclusive [start, end] -> (N, S, D)."""
    N, L, D = x.shape
    S = spans.shape[1]
    S_pad = _round_up(max(S, 1), 8)                         # sublane-aligned span rows
    # Padding spans get [L, -1] -> empty mask, cnt clamps to 1, rows sliced off below.
    starts = jnp.full((N, S_pad, 1), L, jnp.int32).at[:, :S, 0].set(
        spans[..., 0].astype(jnp.int32))
    ends = jnp.full((N, S_pad, 1), -1, jnp.int32).at[:, :S, 0].set(
        spans[..., 1].astype(jnp.int32))

    out = pl.pallas_call(
        _span_pool_kernel,
        out_shape=jax.ShapeDtypeStruct((N, S_pad, D), jnp.float32),
        grid=(N,),
        in_specs=[
            pl.BlockSpec((1, L, D), lambda n: (n, 0, 0)),
            pl.BlockSpec((1, S_pad, 1), lambda n: (n, 0, 0)),
            pl.BlockSpec((1, S_pad, 1), lambda n: (n, 0, 0)),
        ],
        out_specs=pl.BlockSpec((1, S_pad, D), lambda n: (n, 0, 0)),
        compiler_params=pltpu.CompilerParams(dimension_semantics=("parallel",)),
    )(x, starts, ends)
    return out[:, :S, :]


# ----------------------------------------------------------------------------
# Pallas kernel 2: torch.nn.Bilinear over all flattened (N*HT) rows
# ----------------------------------------------------------------------------
def prepare_bilinear_weights(w, b, *, j_chunk=8, compute_dtype=jnp.bfloat16):
    """One-time relayout of nn.Bilinear parameters (hoisted out of the forward path).

    w: (R, F, F), b: (R,).  Returns a dict with:
      w3   : (num_chunks, F_pad, j_chunk*r_pad), w3[c, i, jj*r_pad + r] = w[r, i, c*j_chunk+jj]
      bias : (1, r_pad) f32
    """
    R, F, _ = w.shape
    r_pad = _round_up(max(R, 1), 128)        # lane-dense output slab (R=97 -> 1.32x pad)
    # TODO(synk): for genuinely small deployed R (e.g. 8) the 128-lane pad wastes ~16x
    # MXU FLOPs / slab memory; a relation-major layout would be preferable there.
    F_pad = _round_up(F, max(8, j_chunk))    # sublane-aligned K / j dims
    num_chunks = F_pad // j_chunk
    w_p = jnp.zeros((r_pad, F_pad, F_pad), jnp.float32).at[:R, :F, :F].set(w)
    w2 = jnp.transpose(w_p, (1, 2, 0)).reshape(F_pad, F_pad * r_pad)  # [i, j*r_pad + r]
    w3 = w2.reshape(F_pad, num_chunks, j_chunk * r_pad).transpose(1, 0, 2)
    bias = jnp.zeros((1, r_pad), jnp.float32).at[0, :R].set(b)
    return {
        "w3": w3.astype(compute_dtype), "bias": bias,
        "R": int(R), "F": int(F), "F_pad": int(F_pad), "r_pad": int(r_pad),
        "j_chunk": int(j_chunk), "num_chunks": int(num_chunks),
        "compute_dtype": compute_dtype,
    }


def _bilinear_kernel(head_ref, tail_ref, w_ref, b_ref, o_ref, *,
                     num_chunks, j_chunk, r_pad):
    """out[b, r] = sum_{i,j} head[b, i] * W[r, i, j] * tail[b, j] + bias[r].

    The j-contraction is chunked via fori_loop so the MXU partial result stays at
    (bm, j_chunk*128) instead of the full (bm, F*128) slab -> no VMEM spill storm.
    """
    head = head_ref[...]                                    # (bm, F_pad), compute dtype

    def chunk_body(c, acc):
        # One MXU matmul covering j_chunk feature columns x all (padded) relations.
        t = jnp.dot(head, w_ref[c], preferred_element_type=jnp.float32)  # (bm, jc*r_pad)
        tail_c = tail_ref[c]                                # (bm, j_chunk), f32
        # Short static FMA epilogue on the VPU (f32), free filler under MXU slack.
        for jj in range(j_chunk):
            acc = acc + t[:, jj * r_pad:(jj + 1) * r_pad] * tail_c[:, jj:jj + 1]
        return acc

    acc = jax.lax.fori_loop(0, num_chunks, chunk_body,
                            jnp.zeros(o_ref.shape, jnp.float32))
    o_ref[...] = acc + b_ref[...]                           # lane-dense unmasked store


def bilinear_head(head, tail, bili, *, block_rows=128):
    """nn.Bilinear over flattened rows: out[n, r] = head[n] @ W[r] @ tail[n] + b[r].

    head, tail: (B, F) f32; `bili` from prepare_bilinear_weights().  Returns (B, R) f32.
    block_rows: 128 is safe everywhere; 256-512 is worthwhile on v6e (128 MiB VMEM).
    """
    B, F = head.shape
    assert F == bili["F"], (F, bili["F"])
    F_pad, r_pad = bili["F_pad"], bili["r_pad"]
    jc, nck = bili["j_chunk"], bili["num_chunks"]
    cdt = bili["compute_dtype"]
    R = bili["R"]
    w3, bias = bili["w3"], bili["bias"]

    bm = block_rows if B > block_rows else _round_up(max(B, 1), 8)
    rows_pad = _round_up(B, bm)

    head_p = jnp.zeros((rows_pad, F_pad), cdt).at[:B, :F].set(head.astype(cdt))
    # Tail stays f32: only head and the weight slab feed the MXU; the epilogue is f32.
    tail_p = jnp.zeros((rows_pad, F_pad), jnp.float32).at[:B, :F].set(tail)
    tail3 = tail_p.reshape(rows_pad, nck, jc).transpose(1, 0, 2)   # (nck, rows_pad, jc)

    cdt_b = jnp.dtype(cdt).itemsize
    vmem_need = (
        nck * F_pad * (jc * r_pad) * cdt_b            # resident weight slab (1 buffer)
        + r_pad * 4                                   # bias (1 buffer)
        + 2 * bm * _round_up(F_pad, 128) * cdt_b      # head tile (double-buffered)
        + 2 * nck * bm * 128 * 4                      # tail tile (jc lane-padded to 128)
        + 2 * bm * r_pad * 4                          # output tile (double-buffered)
    )
    vmem_limit = _derive_vmem_limit(vmem_need)

    kernel = functools.partial(_bilinear_kernel, num_chunks=nck, j_chunk=jc, r_pad=r_pad)

    def _call(single_buffer_consts):
        def const_spec(shape):
            zero_map = lambda i: (0,) * len(shape)
            if single_buffer_consts:
                # Constant index map -> the block is never re-fetched; single-buffer it
                # instead of paying 2x VMEM for the weight slab.
                return pl.BlockSpec(shape, zero_map, pipeline_mode=pl.Buffered(1))
            return pl.BlockSpec(shape, zero_map)

        return pl.pallas_call(
            kernel,
            out_shape=jax.ShapeDtypeStruct((rows_pad, r_pad), jnp.float32),
            grid=(rows_pad // bm,),
            in_specs=[
                pl.BlockSpec((bm, F_pad), lambda i: (i, 0)),
                pl.BlockSpec((nck, bm, jc), lambda i: (0, i, 0)),
                const_spec((nck, F_pad, jc * r_pad)),
                const_spec((1, r_pad)),
            ],
            out_specs=pl.BlockSpec((bm, r_pad), lambda i: (i, 0)),
            compiler_params=pltpu.CompilerParams(
                dimension_semantics=("parallel",),
                vmem_limit_bytes=vmem_limit,
            ),
        )(head_p, tail3, w3, bias)

    try:
        out = _call(True)
    except Exception:  # pragma: no cover — Pallas build without pipeline_mode support
        out = _call(False)
    return out[:B, :R]


# ----------------------------------------------------------------------------
# Plain-JAX glue (data-dependent gathers)
# ----------------------------------------------------------------------------
def batched_index_select(x, idx):
    """x: (N, S, D); idx: (N, ...) int -> (N, ..., D)."""
    N, S, D = x.shape
    flat = idx.reshape(N, -1).astype(jnp.int32)
    out = jnp.take_along_axis(x, flat[..., None], axis=1)
    return out.reshape(idx.shape + (D,))


# ----------------------------------------------------------------------------
# Full forward (use_bilinear=True, use_distance=True, mean/mean pooling)
# ----------------------------------------------------------------------------
def bilstm_m_forward(params, sentence_repr, entity_span_indices, entity_span_indices_mask,
                     vertex_indices, vertex_indices_mask, head_tail_indices, relation_mask,
                     dis_h_2_t, dis_t_2_h):
    # 1) entity span embeddings (mean).  entity_span_indices_mask is accepted but, as in
    #    the module's call to SpanExtractor, not consumed here.
    span_emb = span_mean_pool(sentence_repr, entity_span_indices)            # (N, S, D)

    # 2) co-reference (vertex) mean pooling.
    # TODO(synk): these gathers could be fused into the bilinear kernel via scalar
    # prefetch (indices in SMEM); kept as plain-JAX glue here.
    vtx = batched_index_select(span_emb, vertex_indices)                     # (N, V, C, D)
    vmask = vertex_indices_mask.astype(jnp.float32)[..., None]
    vtx = vtx * vmask
    n_coref = vertex_indices_mask.astype(jnp.float32).sum(axis=2)            # (N, V)
    n_coref = n_coref + (n_coref < 1).astype(jnp.float32)
    vertex_emb = vtx.sum(axis=2) / n_coref[..., None]                        # (N, V, D)

    # 3) head/tail gather.  relation_mask intentionally NOT applied (the module's
    #    `head_tail_embeddings * relation_mask...` line is a no-op expression).
    ht_emb = batched_index_select(vertex_emb, head_tail_indices)             # (N, HT, 2, D)
    head_repr = ht_emb[:, :, 0, :]
    tail_repr = ht_emb[:, :, 1, :]

    # 4) distance embeddings (nn.Embedding(20, dis_size, padding_idx=10)) concat.
    dis_tbl = params["dis_embed"]                                            # (20, dis_size)
    head_repr = jnp.concatenate([head_repr, jnp.take(dis_tbl, dis_h_2_t, axis=0)], axis=-1)
    tail_repr = jnp.concatenate([tail_repr, jnp.take(dis_tbl, dis_t_2_h, axis=0)], axis=-1)

    # 5) bilinear relation scores over flattened N*HT rows.
    N, HT, F = head_repr.shape
    scores = bilinear_head(head_repr.reshape(N * HT, F), tail_repr.reshape(N * HT, F),
                           params["bili"])                                   # (N*HT, R)
    predict_re = scores.reshape(N, HT, -1)
    return predict_re, None


# ----------------------------------------------------------------------------
# Pure-JAX reference (for correctness check)
# ----------------------------------------------------------------------------
def bilstm_m_reference(params, sentence_repr, entity_span_indices, entity_span_indices_mask,
                       vertex_indices, vertex_indices_mask, head_tail_indices, relation_mask,
                       dis_h_2_t, dis_t_2_h):
    N, L, D = sentence_repr.shape
    pos = jnp.arange(L)
    starts = entity_span_indices[..., 0]
    ends = entity_span_indices[..., 1]
    m = ((pos[None, None, :] >= starts[..., None]) &
         (pos[None, None, :] <= ends[..., None])).astype(jnp.float32)
    span_emb = jnp.einsum("nsl,nld->nsd", m, sentence_repr) / jnp.maximum(
        m.sum(-1, keepdims=True), 1.0)

    vtx = batched_index_select(span_emb, vertex_indices)
    vtx = vtx * vertex_indices_mask.astype(jnp.float32)[..., None]
    n_coref = vertex_indices_mask.astype(jnp.float32).sum(axis=2)
    n_coref = n_coref + (n_coref < 1).astype(jnp.float32)
    vertex_emb = vtx.sum(axis=2) / n_coref[..., None]

    ht_emb = batched_index_select(vertex_emb, head_tail_indices)
    head_repr = ht_emb[:, :, 0, :]
    tail_repr = ht_emb[:, :, 1, :]
    dis_tbl = params["dis_embed"]
    head_repr = jnp.concatenate([head_repr, jnp.take(dis_tbl, dis_h_2_t, axis=0)], axis=-1)
    tail_repr = jnp.concatenate([tail_repr, jnp.take(dis_tbl, dis_t_2_h, axis=0)], axis=-1)

    logits = jnp.einsum("nhi,rij,nhj->nhr", head_repr, params["w_bili"], tail_repr) \
        + params["b_bili"]
    return logits, None


if __name__ == "__main__":
    # Small shapes consistent with the module's forward signature.
    N, L, D = 2, 16, 32      # batch, seq_len, embed_dim
    S = 6                    # num entity spans
    V, C = 5, 3              # vertexes, max corefs per vertex
    HT = 8                   # relation candidates per example
    DIS = 8                  # dis_size
    R = 8                    # relation_num (97 in the real model)

    key = jax.random.PRNGKey(0)
    ks = jax.random.split(key, 12)

    sentence_repr = jax.random.normal(ks[0], (N, L, D), dtype=jnp.float32)

    starts = jax.random.randint(ks[1], (N, S), 0, L - 3)
    lens = jax.random.randint(ks[2], (N, S), 0, 3)
    entity_span_indices = jnp.stack([starts, starts + lens], axis=-1).astype(jnp.int32)
    entity_span_indices_mask = jnp.ones((N, S), jnp.int32)

    vertex_indices = jax.random.randint(ks[3], (N, V, C), 0, S).astype(jnp.int32)
    vertex_indices_mask = (jax.random.uniform(ks[4], (N, V, C)) > 0.3).astype(jnp.int32)
    vertex_indices_mask = vertex_indices_mask.at[:, V - 1, :].set(0)  # empty-vertex path

    head_tail_indices = jax.random.randint(ks[5], (N, HT, 2), 0, V).astype(jnp.int32)
    relation_mask = jnp.concatenate(
        [jnp.ones((N, HT - 2), jnp.int32), jnp.zeros((N, 2), jnp.int32)], axis=1)

    dis_h_2_t = jax.random.randint(ks[6], (N, HT), 0, 20).astype(jnp.int32)
    dis_t_2_h = jax.random.randint(ks[7], (N, HT), 0, 20).astype(jnp.int32)

    dis_embed = 0.1 * jax.random.normal(ks[8], (20, DIS), dtype=jnp.float32)
    dis_embed = dis_embed.at[10].set(0.0)                   # padding_idx=10

    F = D + DIS
    w_bili = 0.1 * jax.random.normal(ks[9], (R, F, F), dtype=jnp.float32)
    b_bili = 0.01 * jnp.arange(R, dtype=jnp.float32)
    raw_params = {"dis_embed": dis_embed, "w_bili": w_bili, "b_bili": b_bili}

    # One-time weight relayout (hoisted out of the forward path).
    params_f32 = {"dis_embed": dis_embed,
                  "bili": prepare_bilinear_weights(w_bili, b_bili,
                                                   compute_dtype=jnp.float32)}
    params_bf16 = {"dis_embed": dis_embed,
                   "bili": prepare_bilinear_weights(w_bili, b_bili,
                                                    compute_dtype=jnp.bfloat16)}

    args = (sentence_repr, entity_span_indices, entity_span_indices_mask,
            vertex_indices, vertex_indices_mask, head_tail_indices, relation_mask,
            dis_h_2_t, dis_t_2_h)

    # f32 path (tight check against the pure-JAX reference).
    out, _ = bilstm_m_forward(params_f32, *args)
    out = jax.block_until_ready(out)
    ref, _ = bilstm_m_reference(raw_params, *args)
    np.testing.assert_allclose(np.asarray(out), np.asarray(ref), rtol=2e-4, atol=2e-4)

    # bf16 MXU path (v6e/v7x default): bf16 head + weight slab, f32 accumulate,
    # f32 tail + f32 epilogue.
    out_bf16, _ = bilstm_m_forward(params_bf16, *args)
    out_bf16 = jax.block_until_ready(out_bf16)
    np.testing.assert_allclose(np.asarray(out_bf16), np.asarray(ref), rtol=5e-2, atol=2e-1)

    print("KERNEL_OK")
</pallas_src>

<mosaic_0001>
module attributes {stable_mosaic.version = 11 : i64} {
  func.func @_span_pool_kernel(%arg0: i32, %arg1: memref<1x16x32xf32, #tpu.memory_space<vmem>>, %arg2: memref<1x8x1xi32, #tpu.memory_space<vmem>>, %arg3: memref<1x8x1xi32, #tpu.memory_space<vmem>>, %arg4: memref<1x8x32xf32, #tpu.memory_space<vmem>>) attributes {dimension_semantics = [#tpu.dimension_semantics<parallel>], iteration_bounds = array<i64: 2>, scalar_prefetch = 0 : i64, scratch_operands = 0 : i64, tpu.core_type = #tpu.core_type<tc>, window_params = [{transform_indices = @transform_0, window_bounds = array<i64: 1, 16, 32>}, {transform_indices = @transform_1, window_bounds = array<i64: 1, 8, 1>}, {transform_indices = @transform_2, window_bounds = array<i64: 1, 8, 1>}, {transform_indices = @transform_3, window_bounds = array<i64: 1, 8, 32>}]} {
    %c0 = arith.constant 0 : index
    %c0_0 = arith.constant 0 : index
    %c0_1 = arith.constant 0 : index
    %0 = vector.load %arg1[%c0, %c0_0, %c0_1] : memref<1x16x32xf32, #tpu.memory_space<vmem>>, vector<1x16x32xf32>
    %1 = vector.shape_cast %0 : vector<1x16x32xf32> to vector<16x32xf32>
    %c0_2 = arith.constant 0 : index
    %c0_3 = arith.constant 0 : index
    %c0_4 = arith.constant 0 : index
    %2 = vector.load %arg2[%c0_2, %c0_3, %c0_4] : memref<1x8x1xi32, #tpu.memory_space<vmem>>, vector<1x8x1xi32>
    %3 = vector.shape_cast %2 : vector<1x8x1xi32> to vector<8x1xi32>
    %c0_5 = arith.constant 0 : index
    %c0_6 = arith.constant 0 : index
    %c0_7 = arith.constant 0 : index
    %4 = vector.load %arg3[%c0_5, %c0_6, %c0_7] : memref<1x8x1xi32, #tpu.memory_space<vmem>>, vector<1x8x1xi32>
    %5 = vector.shape_cast %4 : vector<1x8x1xi32> to vector<8x1xi32>
    %6 = tpu.iota {dimensions = array<i32: 1>} : vector<8x16xi32>
    %7 = vector.broadcast %3 : vector<8x1xi32> to vector<8x16xi32>
    %8 = arith.cmpi sge, %6, %7 : vector<8x16xi32>
    %9 = vector.broadcast %5 : vector<8x1xi32> to vector<8x16xi32>
    %10 = arith.cmpi sle, %6, %9 : vector<8x16xi32>
    %11 = arith.andi %8, %10 : vector<8x16xi1>
    %12 = arith.extui %11 : vector<8x16xi1> to vector<8x16xi32>
    %13 = arith.sitofp %12 : vector<8x16xi32> to vector<8x16xf32>
    %cst = arith.constant dense<0.000000e+00> : vector<8x32xf32>
    %14 = tpu.matmul %13, %1, %cst {dimension_numbers = #tpu.dot_dimension_numbers<[1], [0], [0], [1], [0, 0, 1, 1], [], []>} : vector<8x16xf32>, vector<16x32xf32>, vector<8x32xf32> -> vector<8x32xf32>
    %15 = arith.subi %5, %3 : vector<8x1xi32>
    %c1_i32 = arith.constant 1 : i32
    %16 = vector.broadcast %c1_i32 : i32 to vector<8x1xi32>
    %17 = arith.addi %15, %16 : vector<8x1xi32>
    %c1_i32_8 = arith.constant 1 : i32
    %18 = vector.broadcast %c1_i32_8 : i32 to vector<8x1xi32>
    %19 = arith.maxsi %17, %18 : vector<8x1xi32>
    %20 = arith.sitofp %19 : vector<8x1xi32> to vector<8x1xf32>
    %21 = vector.broadcast %20 : vector<8x1xf32> to vector<8x32xf32>
    %22 = arith.divf %14, %21 : vector<8x32xf32>
    %c0_9 = arith.constant 0 : index
    %c0_10 = arith.constant 0 : index
    %c0_11 = arith.constant 0 : index
    %23 = vector.load %arg4[%c0_9, %c0_10, %c0_11] : memref<1x8x32xf32, #tpu.memory_space<vmem>>, vector<1x8x32xf32>
    %24 = vector.shape_cast %23 : vector<1x8x32xf32> to vector<8x32xf32>
    %25 = vector.shape_cast %22 : vector<8x32xf32> to vector<1x8x32xf32>
    tpu.vector_store %arg4[%c0_9, %c0_10, %c0_11], %25 {strides = array<i32>} : memref<1x8x32xf32, #tpu.memory_space<vmem>>, vector<1x8x32xf32>,
    return
  }
  func.func @transform_0(%arg0: i32) -> (i32, i32, i32) {
    %c0_i32 = arith.constant 0 : i32
    %c0_i32_0 = arith.constant 0 : i32
    %c0_i32_1 = arith.constant 0 : i32
    return %arg0, %c0_i32, %c0_i32_0 : i32, i32, i32
  }
  func.func @transform_1(%arg0: i32) -> (i32, i32, i32) {
    %c0_i32 = arith.constant 0 : i32
    %c0_i32_0 = arith.constant 0 : i32
    %c0_i32_1 = arith.constant 0 : i32
    return %arg0, %c0_i32, %c0_i32_0 : i32, i32, i32
  }
  func.func @transform_2(%arg0: i32) -> (i32, i32, i32) {
    %c0_i32 = arith.constant 0 : i32
    %c0_i32_0 = arith.constant 0 : i32
    %c0_i32_1 = arith.constant 0 : i32
    return %arg0, %c0_i32, %c0_i32_0 : i32, i32, i32
  }
  func.func @transform_3(%arg0: i32) -> (i32, i32, i32) {
    %c0_i32 = arith.constant 0 : i32
    %c0_i32_0 = arith.constant 0 : i32
    %c0_i32_1 = arith.constant 0 : i32
    return %arg0, %c0_i32, %c0_i32_0 : i32, i32, i32
  }
}

</mosaic_0001>

<llo_original>
// kernel: tpu_custom_call.1
$region0: #{tpu_custom_call.1}
  #allocation0 [shape = 'u32[]', space=smem, size = 0x4, offset = 0x4, fixed_abs, tag = 'smem constant byte address 0x4 - core index']
  #allocation1 [shape = 'u32[72,128]{1,0:T(1,128)}', space=vmem, size = 0x9000, scoped, tag = 'internal scratch']
  %s0 = inlined_call_operand.vmem [shape: f32[2,16,32], index: 0, kind: input, shape index: {}]
  %s1 = inlined_call_operand.vmem [shape: s32[2,8,1], index: 1, kind: input, shape index: {}]
  %s2 = inlined_call_operand.vmem [shape: s32[2,8,1], index: 2, kind: input, shape index: {}]
  %s3 = inlined_call_operand.hbm [shape: f32[2,8,32], index: 3, kind: output, shape index: {}]
  %s4 = sld [smem:[#allocation0]]
  $region45: #{tpu_custom_call.1} parent=0
    _
  %s6 = ssub.s32 1, %s4
  %s7 = scalar_select 0, %s6, %s4
  $region1: #{tpu_custom_call.1} parent=0
    #allocation2 [shape = 'u8[8192]{0}', space=vmem, size = 0x2000, scoped, tag = 'output window, operand 0']
    #allocation3 [shape = 's32[2]{0}', space=sflag, size = 0x8, scoped, tag = 'scoped memory for tpu_custom_call.1']
    %8 = vsyncpa [#allocation3], 0
    %s9 = scalar_lea.sflag [#allocation3], 1
    %10 = vsyncpa %s9, 0
    loop: start=0, step=1, limit=4
    $region2: #{tpu_custom_call.1} parent=1 // loop_pre_header
      _
    $region3: #{tpu_custom_call.1} parent=1 // loop_header
      %s12 = sphi 0, %s16
      %p13 = scmp.ge.s32.totalorder %s12, 4
      %s22 = sphi 0, %s24
      %s25 = sphi 0, %s22
      %s26 = sphi 0, %s25
      %s42 = sphi 0, %s26
      %s48 = sphi 0, %s50
      %s51 = sphi 0, %s48
      %s52 = sphi 0, %s51
      %s68 = sphi 0, %s52
      %s74 = sphi 0, %s76
      %s77 = sphi 0, %s74
      %s78 = sphi 0, %s77
      %s94 = sphi 0, %s78
      %s100 = sphi 0, %s102
      %s103 = sphi 0, %s100
      %s104 = sphi 0, %s103
      %s120 = sphi 0, %s104
    $region4: #{tpu_custom_call.1} parent=1 // loop_header_branch
      %15 = sbr.rel (%p13) target = $region8
    $region5: #{tpu_custom_call.1} parent=1 // loop_body
      %s17 = ssub.s32 %s12, 1
      %s18 = ssub.s32 %s12, 2
      %s19 = sadd.s32 %s12, 1
      %s20 = ssub.s32 %s12, %s19
      %p21 = scmp.eq.s32.totalorder %s20, 0
      %s23 = sadd.s32 %s22, 1
      %s24 = scalar_select %p21, %s22, %s23
      %p27 = pneg %p21
      %p28 = scmp.eq.s32.totalorder %s12, 1
      %p29 = por %p27, %p28
      %p30 = scmp.ne.s32.totalorder %s22, %s25
      %p31 = scmp.eq.s32.totalorder %s12, 0
      %p32 = por %p30, %p31
      %p33 = scmp.ne.s32.totalorder %s22, %s25
      %p34 = scmp.eq.s32.totalorder %s17, 1
      %p35 = por %p33, %p34
      %p36 = scmp.ne.s32.totalorder %s25, %s26
      %p37 = scmp.eq.s32.totalorder %s17, 0
      %p38 = por %p36, %p37
      %p39 = scmp.ne.s32.totalorder %s25, %s26
      %p40 = scmp.eq.s32.totalorder %s18, 1
      %p41 = por %p39, %p40
      %p43 = scmp.ne.s32.totalorder %s26, %s42
      %p44 = scmp.eq.s32.totalorder %s18, 0
      %p45 = por %p43, %p44
      %s46 = ssub.s32 %s12, %s19
      %p47 = scmp.eq.s32.totalorder %s46, 0
      %s49 = sadd.s32 %s48, 1
      %s50 = scalar_select %p47, %s48, %s49
      %p53 = pneg %p47
      %p54 = scmp.eq.s32.totalorder %s12, 1
      %p55 = por %p53, %p54
      %p56 = scmp.ne.s32.totalorder %s48, %s51
      %p57 = scmp.eq.s32.totalorder %s12, 0
      %p58 = por %p56, %p57
      %p59 = scmp.ne.s32.totalorder %s48, %s51
      %p60 = scmp.eq.s32.totalorder %s17, 1
      %p61 = por %p59, %p60
      %p62 = scmp.ne.s32.totalorder %s51, %s52
      %p63 = scmp.eq.s32.totalorder %s17, 0
      %p64 = por %p62, %p63
      %p65 = scmp.ne.s32.totalorder %s51, %s52
      %p66 = scmp.eq.s32.totalorder %s18, 1
      %p67 = por %p65, %p66
      %p69 = scmp.ne.s32.totalorder %s52, %s68
      %p70 = scmp.eq.s32.totalorder %s18, 0
      %p71 = por %p69, %p70
      %s72 = ssub.s32 %s12, %s19
      %p73 = scmp.eq.s32.totalorder %s72, 0
      %s75 = sadd.s32 %s74, 1
      %s76 = scalar_select %p73, %s74, %s75
      %p79 = pneg %p73
      %p80 = scmp.eq.s32.totalorder %s12, 1
      %p81 = por %p79, %p80
      %p82 = scmp.ne.s32.totalorder %s74, %s77
      %p83 = scmp.eq.s32.totalorder %s12, 0
      %p84 = por %p82, %p83
      %p85 = scmp.ne.s32.totalorder %s74, %s77
      %p86 = scmp.eq.s32.totalorder %s17, 1
      %p87 = por %p85, %p86
      %p88 = scmp.ne.s32.totalorder %s77, %s78
      %p89 = scmp.eq.s32.totalorder %s17, 0
      %p90 = por %p88, %p89
      %p91 = scmp.ne.s32.totalorder %s77, %s78
      %p92 = scmp.eq.s32.totalorder %s18, 1
      %p93 = por %p91, %p92
      %p95 = scmp.ne.s32.totalorder %s78, %s94
      %p96 = scmp.eq.s32.totalorder %s18, 0
      %p97 = por %p95, %p96
      %s98 = ssub.s32 %s12, %s19
      %p99 = scmp.eq.s32.totalorder %s98, 0
      %s101 = sadd.s32 %s100, 1
      %s102 = scalar_select %p99, %s100, %s101
      %p105 = pneg %p99
      %p106 = scmp.eq.s32.totalorder %s12, 1
      %p107 = por %p105, %p106
      %p108 = scmp.ne.s32.totalorder %s100, %s103
      %p109 = scmp.eq.s32.totalorder %s12, 0
      %p110 = por %p108, %p109
      %p111 = scmp.ne.s32.totalorder %s100, %s103
      %p112 = scmp.eq.s32.totalorder %s17, 1
      %p113 = por %p111, %p112
      %p114 = scmp.ne.s32.totalorder %s103, %s104
      %p115 = scmp.eq.s32.totalorder %s17, 0
      %p116 = por %p114, %p115
      %p117 = scmp.ne.s32.totalorder %s103, %s104
      %p118 = scmp.eq.s32.totalorder %s18, 1
      %p119 = por %p117, %p118
      %p121 = scmp.ne.s32.totalorder %s104, %s120
      %p122 = scmp.eq.s32.totalorder %s18, 0
      %p123 = por %p121, %p122
      %p124 = scmp.le.s32.totalorder 1, %s12
      %p125 = scmp.lt.s32.totalorder %s12, 3
      %p126 = pnand %p124, %p125
      %p127 = pneg %p126
      // Predicated region
      $region9: #{tpu_custom_call.1} parent=5 // pred_check
        _
      $region10: #{tpu_custom_call.1} parent=5 // pred_check_branch
        %129 = sbr.rel (%p126) target = $region12
      $region11: #{tpu_custom_call.1} parent=5 // pred_region
        %s130 = ssub.s32 %s12, 1
      $region12: #{tpu_custom_call.1} parent=5 // pred_fallthru
        _
      %p131 = scmp.lt.s32.totalorder %s12, 2
      // Predicated region
      $region13: #{tpu_custom_call.1} parent=5 // pred_check
        %p132 = pneg %p131
      $region14: #{tpu_custom_call.1} parent=5 // pred_check_branch
        %134 = sbr.rel (%p132) target = $region16
      $region15: #{tpu_custom_call.1} parent=5 // pred_region
        // Predicated region
        $region17: #{tpu_custom_call.1} parent=15 // pred_check
          %p135 = pneg %p32
        $region18: #{tpu_custom_call.1} parent=15 // pred_check_branch
          %137 = sbr.rel (%p135) target = $region20
        $region19: #{tpu_custom_call.1} parent=15 // pred_region
          %p138 = scmp.lt.s32.totalorder %s12, 1
          %s139 = scalar_select %p138, %s12, 1
          %s140 = smul.addr %s139, 2
          %s141 = smul.addr %s140, 8
          %s142 = scalar_lea.vmem %s0, %s141
        $region20: #{tpu_custom_call.1} parent=15 // pred_fallthru
          _
        // Predicated region
        $region21: #{tpu_custom_call.1} parent=15 // pred_check
          %p143 = pneg %p58
        $region22: #{tpu_custom_call.1} parent=15 // pred_check_branch
          %145 = sbr.rel (%p143) target = $region24
        $region23: #{tpu_custom_call.1} parent=15 // pred_region
          %p146 = scmp.lt.s32.totalorder %s12, 1
          %s147 = scalar_select %p146, %s12, 1
          %s148 = smul.addr %s147, 8
          %s149 = scalar_lea.vmem %s1, %s148
        $region24: #{tpu_custom_call.1} parent=15 // pred_fallthru
          _
        // Predicated region
        $region25: #{tpu_custom_call.1} parent=15 // pred_check
          %p150 = pneg %p84
        $region26: #{tpu_custom_call.1} parent=15 // pred_check_branch
          %152 = sbr.rel (%p150) target = $region28
        $region27: #{tpu_custom_call.1} parent=15 // pred_region
          %p153 = scmp.lt.s32.totalorder %s12, 1
          %s154 = scalar_select %p153, %s12, 1
          %s155 = smul.addr %s154, 8
          %s156 = scalar_lea.vmem %s2, %s155
        $region28: #{tpu_custom_call.1} parent=15 // pred_fallthru
          _
      $region16: #{tpu_custom_call.1} parent=5 // pred_fallthru
        _
      %p157 = scmp.le.s32.totalorder 1, %s12
      %p158 = scmp.lt.s32.totalorder %s12, 3
      %p159 = pnand %p157, %p158
      %p160 = pneg %p159
      // Predicated region
      $region29: #{tpu_custom_call.1} parent=5 // pred_check
        _
      $region30: #{tpu_custom_call.1} parent=5 // pred_check_branch
        %162 = sbr.rel (%p159) target = $region32
      $region31: #{tpu_custom_call.1} parent=5 // pred_region
        %s163 = ssub.s32 %s12, 1
        %p164 = scmp.lt.s32.totalorder %s17, 1
        %s165 = scalar_select %p164, %s17, 1
        %s166 = smul.addr %s165, 2
        %s167 = smul.addr %s166, 8
        %s168 = scalar_lea.vmem %s0, %s167
        %p169 = pneg %p38
        %p170 = pneg %p35
        %p171 = scmp.lt.s32.totalorder %s17, 1
        %s172 = scalar_select %p171, %s17, 1
        %s173 = smul.addr %s172, 8
        %s174 = scalar_lea.vmem %s1, %s173
        %p175 = pneg %p64
        %p176 = pneg %p61
        %p177 = scmp.lt.s32.totalorder %s17, 1
        %s178 = scalar_select %p177, %s17, 1
        %s179 = smul.addr %s178, 8
        %s180 = scalar_lea.vmem %s2, %s179
        %p181 = pneg %p90
        %p182 = pneg %p87
        %p183 = pneg %p116
        %p184 = pneg %p113
        %s185 = sand.u32 %s103, 1
        %s186 = scalar_lea.sflag [#allocation3], %s185
        %s187 = sand.u32 %s103, 1
        %s188 = smul.addr %s187, 8
        %s189 = scalar_lea.vmem [#allocation2], %s188
        %p190 = scmp.lt.s32.totalorder %s17, 1
        %s191 = scalar_select %p190, %s17, 1
        %s192 = smul.addr %s191, 2
        %s193 = smul.addr %s192, 8
        %s194 = scalar_lea.vmem %s0, %s193
        %p195 = scmp.lt.s32.totalorder %s17, 1
        %s196 = scalar_select %p195, %s17, 1
        %s197 = smul.addr %s196, 8
        %s198 = scalar_lea.vmem %s1, %s197
        %p199 = scmp.lt.s32.totalorder %s17, 1
        %s200 = scalar_select %p199, %s17, 1
        %s201 = smul.addr %s200, 8
        %s202 = scalar_lea.vmem %s2, %s201
        %v203 = vld [vmem:[%s194] sm:$0xff]
        %v204 = vld [vmem:[%s194 + $0x8] sm:$0xff]
        %v205 = vld [vmem:[%s198] sm:$0xff]
        %v206 = vld [vmem:[%s202] sm:$0xff]
        %v207 = vlaneseq
        %v208 = vand.u32 %v207, 127
        %209 = vset.pattern.permute.xlu0 0
        %210 = vperm.xlu0 %209, %v205
        %v211 = vpop.permute.xlu0 %210
        %vm212 = vcmp.ge.s32.totalorder %v208, %v211
        %213 = vset.pattern.permute.xlu0 0
        %214 = vperm.xlu0 %213, %v206
        %v215 = vpop.permute.xlu0 %214
        %vm216 = vcmp.le.s32.totalorder %v208, %v215
        %vm217 = vmand %vm212, %vm216
        %v218 = vsel %vm217, 1, 0
        %v219 = vcvt.s32.f32 %v218
        %vm220 = vcmask 130048
        %v222 = vsel %vm220, %v219, 0
        %224 = vmatpush.msra.mxu0 0.0
        %225 = vmatpush.msra.mxu0 0.0
        %226 = vmatpush.msra.mxu0 0.0
        %227 = vmatpush.msra.mxu0 0.0
        %228 = vmatpush.msra.mxu0 0.0
        %229 = vmatpush.msra.mxu0 0.0
        %230 = vmatpush.msra.mxu0 0.0
        %231 = vmatpush.msra.mxu0 0.0
        %232 = vmatpush.msra.mxu0 0.0
        %233 = vmatpush.msra.mxu0 0.0
        %234 = vmatpush.msra.mxu0 0.0
        %235 = vmatpush.msra.mxu0 0.0
        %236 = vmatpush.msra.mxu0 0.0
        %237 = vmatpush.msra.mxu0 0.0
        %238 = vmatpush.msra.mxu0 %v204
        %239 = vmatpush.msra.mxu0 %v203
        %240 = vmatmul.f32.gmra.mxu0 %v222
        %v241 = vpop.f32.mrf.mxu0
        %v242 = vadd.f32 0.0, %v241
        %243 = vdwg.mxu0
        %v244 = vsub.s32 %v206, %v205
        %v245 = vadd.s32 %v244, 1
        %vm246 = vcmp.gt.s32.totalorder %v245, 1
        %v247 = vsel %vm246, %v245, 1
        %v248 = vcvt.s32.f32 %v247
        %250 = vset.pattern.permute.xlu0 0
        %251 = vperm.xlu0 %250, %v248
        %v252 = vpop.permute.xlu0 %251
        %v254 = vrcp.pop %v252
        %v255 = vmul.f32 %v252, %v254
        %v256 = vsub.f32 1.0, %v255
        %v257 = vmul.f32 %v254, %v256
        %v258 = vadd.f32 %v254, %v257
        %vm259 = vweird.f32 %v252
        %vm260 = vweird.f32 %v254
        %vm261 = vmor %vm259, %vm260
        %v262 = vsel %vm261, %v254, %v258
        %v263 = vand.u32 2147483647, %v252
        %vm264 = vcmp.eq.f32.partialorder %v263, 8.507059e+37
        %v265 = vand.u32 %v252, 2147483648
        %v266 = vor.u32 1.1754944e-38, %v265
        %v267 = vsel %vm264, %v266, %v262
        %v268 = vmul.f32 %v242, %v267
        %vm269 = vcmask 261120
        %270 = vst.msk [vmem:[%s189] sm:$0xff] %vm269, %v268
        %s271 = sand.u32 %s103, 1
        %s272 = scalar_lea.sflag [#allocation3], %s271
        %s273 = sand.u32 %s103, 1
        %s274 = smul.addr %s273, 8
        %s275 = scalar_lea.vmem [#allocation2], %s274
        // Predicated region
        $region33: #{tpu_custom_call.1} parent=31 // pred_check
          %p276 = pneg %p113
        $region34: #{tpu_custom_call.1} parent=31 // pred_check_branch
          %278 = sbr.rel (%p276) target = $region36
        $region35: #{tpu_custom_call.1} parent=31 // pred_region
          %280 = vsyncadd %s272, 0
          %s281 = smul.addr %s17, 8
          %s282 = scalar_lea.hbm %s3, %s281
          %s284 = sshll.u32 %s275, 4
          %s285 = int_to_ptr.vmem [resolvable:$true] %s284
          %s286 = sshll.u32 %s282, 4
          %s287 = int_to_ptr.hbm [resolvable:$true] %s286
          %289 = dma.vmem_to_hbm [thread:$0]  %s285, 128, %s287, %s272
        $region36: #{tpu_custom_call.1} parent=31 // pred_fallthru
          _
      $region32: #{tpu_custom_call.1} parent=5 // pred_fallthru
        _
      %p290 = scmp.le.s32.totalorder 2, %s12
      // Predicated region
      $region37: #{tpu_custom_call.1} parent=5 // pred_check
        %p291 = pneg %p290
      $region38: #{tpu_custom_call.1} parent=5 // pred_check_branch
        %293 = sbr.rel (%p291) target = $region40
      $region39: #{tpu_custom_call.1} parent=5 // pred_region
        %s294 = ssub.s32 %s12, 2
        // Predicated region
        $region41: #{tpu_custom_call.1} parent=39 // pred_check
          %p295 = pneg %p119
        $region42: #{tpu_custom_call.1} parent=39 // pred_check_branch
          %297 = sbr.rel (%p295) target = $region44
        $region43: #{tpu_custom_call.1} parent=39 // pred_region
          %s298 = sand.u32 %s104, 1
          %s299 = scalar_lea.sflag [#allocation3], %s298
          %s300 = sand.u32 %s104, 1
          %s301 = smul.addr %s300, 8
          %s302 = scalar_lea.vmem [#allocation2], %s301
          %304 = dma.done %s299, 128
        $region44: #{tpu_custom_call.1} parent=39 // pred_fallthru
          _
      $region40: #{tpu_custom_call.1} parent=5 // pred_fallthru
        _
    $region6: #{tpu_custom_call.1} parent=1 // loop_footer
      %s16 = sadd.s32 1, %s12
    $region7: #{tpu_custom_call.1} parent=1 // loop_footer_branch
      %11 = sbr.rel target = $region3
    $region8: #{tpu_custom_call.1} parent=1 // loop_exit
      _
    %305 = vsyncpa [#allocation3], 1
    %s306 = scalar_lea.sflag [#allocation3], 1
    %307 = vsyncpa %s306, 1

</llo_original>
